<compile_context>
chip_gen: v7x
topology: tpu7x:2x2x1
jax: 0.10.0
libtpu: 0.0.40
codegen_flags: <defaults>
</compile_context>

<pallas_src>
import functools
import math

import jax
import jax.numpy as jnp
from jax.experimental import pallas as pl
from jax.experimental.pallas import tpu as pltpu

# small test shapes (real model: embeddings_dim=1024, d_model=512)
BATCH = 2
EMB_DIM = 128        # embeddings_dim (multiple of 128 -> lane-dense)
SEQ_LEN = 16         # sequence_length
KERNEL_SIZE = 9
D_MODEL = 128        # d_model
MASK_FILL = -1e9


# ----------------------------------------------------------------------------
# Kernel: grid = (batch, conv tap)
# ----------------------------------------------------------------------------
def light_attention_kernel(x_ref, wc_ref, bc_ref, wh1_ref, wh2_ref, bh_ref,
                           o_ref, acc_ref, *, seq_len, kernel_size, emb_dim,
                           d_model):
    """Refs (per grid step (b, k)):
       x_ref   : (L + 2*pad, E) f32   zero-padded channel-last activations of row b
       wc_ref  : (E, 2E)        bf16  tap-k weights of BOTH convs fused on out-channels
       bc_ref  : (1, 2E)        f32   [feature bias | attention bias]
       wh1/wh2 : (E, 2D)        bf16  [information | gate] weights, o1 / o2 halves
       bh_ref  : (1, 2D)        f32   [information bias | gate bias]
       o_ref   : (1, D)         f32   output row b
       acc_ref : (L, 2E)        f32   running conv accumulator (feat | att)
    """
    k = pl.program_id(1)
    L, E, D = seq_len, emb_dim, d_model
    pad = kernel_size // 2

    @pl.when(k == 0)
    def _():
        acc_ref[...] = jnp.zeros_like(acc_ref)

    # Tap k of both Conv1d's as ONE (L, E) @ (E, 2E) bf16 MXU matmul, f32 accumulation.
    xk = x_ref[pl.ds(k, L), :].astype(jnp.bfloat16)
    acc_ref[...] += jnp.dot(xk, wc_ref[...], preferred_element_type=jnp.float32)

    @pl.when(k == kernel_size - 1)
    def _():
        acc = acc_ref[...] + bc_ref[...]                       # (L, 2E)
        feat, att = acc[:, :E], acc[:, E:]

        # create_padding_mask: channel 0 of the (unshifted) input != 0
        valid = x_ref[pad:pad + L, 0:1] != 0.0                 # (L, 1)
        att = jnp.where(valid, att, MASK_FILL)

        # masked softmax over the sequence axis + attention / max pooling
        att = att - jnp.max(att, axis=0, keepdims=True)
        p = jnp.exp(att)
        p = p * pl.reciprocal(jnp.sum(p, axis=0, keepdims=True), approx=True)
        o1 = jnp.sum(feat * p, axis=0, keepdims=True)          # (1, E) attention-pooled
        o2 = jnp.max(feat, axis=0, keepdims=True)              # (1, E) max-pooled (unmasked, as in torch)

        # cat([o1, o2]) @ [Wi | Wg]  ==  o1 @ W[:E] + o2 @ W[E:]   (info + gate fused)
        head = (jnp.dot(o1.astype(jnp.bfloat16), wh1_ref[...],
                        preferred_element_type=jnp.float32)
                + jnp.dot(o2.astype(jnp.bfloat16), wh2_ref[...],
                          preferred_element_type=jnp.float32)
                + bh_ref[...])                                  # (1, 2D)
        info = head[:, :D]
        gate = pl.reciprocal(1.0 + jnp.exp(-head[:, D:]), approx=True)  # sigmoid via EUP
        o_ref[...] = info * gate


# ----------------------------------------------------------------------------
# Wrapper: layout plumbing + one pallas_call with grid (B, K)
# ----------------------------------------------------------------------------
def light_attention_forward(x, params):
    """x: (B, embeddings_dim, L) f32 (PyTorch layout) -> (B, d_model) f32."""
    B, E, L = x.shape
    K = params['wf'].shape[0]
    pad = K // 2
    D = params['wi'].shape[1]
    L_pad = L + 2 * pad

    # single zero-padded, channel-last activation copy (no K-times replication)
    x_ble = jnp.transpose(x, (0, 2, 1))                            # (B, L, E)
    x_pad = jnp.pad(x_ble, ((0, 0), (pad, pad), (0, 0)))           # (B, L_pad, E) f32

    # fuse both convolutions along the output-channel axis; bf16 weights
    w_conv = jnp.concatenate([params['wf'], params['wa']], axis=2).astype(jnp.bfloat16)
    b_conv = jnp.concatenate([params['bf'], params['ba']], axis=1)                 # (1, 2E) f32
    # fuse the two head Linears: o1 / o2 halves of the (2E, 2D) fused weight; bf16
    w_head1 = jnp.concatenate([params['wi'][:E], params['wg'][:E]], axis=1).astype(jnp.bfloat16)
    w_head2 = jnp.concatenate([params['wi'][E:], params['wg'][E:]], axis=1).astype(jnp.bfloat16)
    b_head = jnp.concatenate([params['bi'], params['bg']], axis=1)                 # (1, 2D) f32

    # VMEM budget from the actual block footprint (double-buffered streamed blocks).
    vmem_bytes = (2 * L_pad * E * 4            # x block (resident per b, 2 bufs)
                  + 2 * E * 2 * E * 2          # conv-weight tap (streamed, 2 bufs, bf16)
                  + 2 * 2 * E * 4              # conv bias
                  + 2 * 2 * E * 2 * D * 2      # head weights (two halves, bf16)
                  + 2 * 2 * D * 4              # head bias
                  + 2 * D * 4 * 2              # output block
                  + L * 2 * E * 4)             # accumulator scratch
    vmem_limit = min(max(2 * vmem_bytes, 4 << 20), 64 << 20)

    kernel = functools.partial(light_attention_kernel, seq_len=L, kernel_size=K,
                               emb_dim=E, d_model=D)

    out = pl.pallas_call(
        kernel,
        out_shape=jax.ShapeDtypeStruct((B, 1, D), jnp.float32),
        grid=(B, K),
        in_specs=[
            pl.BlockSpec((None, L_pad, E), lambda b, k: (b, 0, 0)),   # x: resident per b
            pl.BlockSpec((None, E, 2 * E), lambda b, k: (k, 0, 0)),   # conv tap: streamed over k
            pl.BlockSpec((1, 2 * E), lambda b, k: (0, 0)),            # conv bias
            pl.BlockSpec((E, 2 * D), lambda b, k: (0, 0)),            # head W (o1 half)
            pl.BlockSpec((E, 2 * D), lambda b, k: (0, 0)),            # head W (o2 half)
            pl.BlockSpec((1, 2 * D), lambda b, k: (0, 0)),            # head bias
        ],
        out_specs=pl.BlockSpec((None, 1, D), lambda b, k: (b, 0, 0)),
        scratch_shapes=[pltpu.VMEM((L, 2 * E), jnp.float32)],
        compiler_params=pltpu.CompilerParams(
            dimension_semantics=("parallel", "arbitrary"),
            vmem_limit_bytes=vmem_limit,
        ),
    )(x_pad, w_conv, b_conv, w_head1, w_head2, b_head)
    return out.reshape(B, D)


# ----------------------------------------------------------------------------
# Pure-JAX reference (mirrors the PyTorch forward, eval mode) + synthetic params
# ----------------------------------------------------------------------------
def _conv1d_ref(x, w_kio, b):
    # x: (B, E, L); w_kio: (K, E_in, E_out) -> torch Conv1d layout (E_out, E_in, K)
    w_oik = jnp.transpose(w_kio, (2, 1, 0))
    y = jax.lax.conv_general_dilated(
        x, w_oik, window_strides=(1,),
        padding=[(w_kio.shape[0] // 2,) * 2],
        dimension_numbers=('NCH', 'OIH', 'NCH'))
    return y + b.reshape(1, -1, 1)


def light_attention_ref(x, params):
    o = _conv1d_ref(x, params['wf'], params['bf'])
    a = _conv1d_ref(x, params['wa'], params['ba'])
    mask = x[:, 0, :] != 0
    a = jnp.where(mask[:, None, :], a, MASK_FILL)
    w = jax.nn.softmax(a, axis=-1)
    o1 = jnp.sum(o * w, axis=-1)
    o2 = jnp.max(o, axis=-1)
    oc = jnp.concatenate([o1, o2], axis=-1)
    gate = jax.nn.sigmoid(oc @ params['wg'] + params['bg'])
    info = oc @ params['wi'] + params['bi']
    return info * gate


def init_params(key, *, emb_dim, d_model, kernel_size):
    ks = jax.random.split(key, 8)
    conv_scale = 1.0 / math.sqrt(emb_dim * kernel_size)
    lin_scale = 1.0 / math.sqrt(2 * emb_dim)
    normal = jax.random.normal
    return {
        # conv weights stored (K, E_in, E_out): wf[k][ci, co] == torch_weight[co, ci, k]
        'wf': conv_scale * normal(ks[0], (kernel_size, emb_dim, emb_dim), jnp.float32),
        'bf': 0.01 * normal(ks[1], (1, emb_dim), jnp.float32),
        'wa': conv_scale * normal(ks[2], (kernel_size, emb_dim, emb_dim), jnp.float32),
        'ba': 0.01 * normal(ks[3], (1, emb_dim), jnp.float32),
        # Linear(2E, D) stored pre-transposed: (2E, D)
        'wi': lin_scale * normal(ks[4], (2 * emb_dim, d_model), jnp.float32),
        'bi': 0.01 * normal(ks[5], (1, d_model), jnp.float32),
        'wg': lin_scale * normal(ks[6], (2 * emb_dim, d_model), jnp.float32),
        'bg': 0.01 * normal(ks[7], (1, d_model), jnp.float32),
    }


if __name__ == "__main__":
    key = jax.random.PRNGKey(0)
    k_par, k_x = jax.random.split(key)
    params = init_params(k_par, emb_dim=EMB_DIM, d_model=D_MODEL,
                         kernel_size=KERNEL_SIZE)

    # input in PyTorch layout (B, embeddings_dim, L); zero the tail of sequence 1 so
    # the padding mask (channel 0 == 0) is actually exercised.
    x = jax.random.normal(k_x, (BATCH, EMB_DIM, SEQ_LEN), jnp.float32)
    x = x.at[1, :, SEQ_LEN - 5:].set(0.0)
    # TODO(synk): nn.Dropout(conv_dropout) is an eval-mode identity and is omitted.

    out = jax.jit(light_attention_forward)(x, params)
    out = jax.block_until_ready(out)
    assert out.shape == (BATCH, D_MODEL)

    ref = light_attention_ref(x, params)
    err = float(jnp.max(jnp.abs(out - ref)))
    assert err < 5e-2, f"max abs error vs reference: {err}"
    print("KERNEL_OK")
</pallas_src>

<mosaic_0001>
module attributes {stable_mosaic.version = 11 : i64} {
  func.func @light_attention_kernel(%arg0: i32, %arg1: i32, %arg2: memref<1x24x128xf32, #tpu.memory_space<vmem>>, %arg3: memref<1x128x256xbf16, #tpu.memory_space<vmem>>, %arg4: memref<1x256xf32, #tpu.memory_space<vmem>>, %arg5: memref<128x256xbf16, #tpu.memory_space<vmem>>, %arg6: memref<128x256xbf16, #tpu.memory_space<vmem>>, %arg7: memref<1x256xf32, #tpu.memory_space<vmem>>, %arg8: memref<1x1x128xf32, #tpu.memory_space<vmem>>, %arg9: memref<16x256xf32, #tpu.memory_space<vmem>>) attributes {dimension_semantics = [#tpu.dimension_semantics<parallel>, #tpu.dimension_semantics<arbitrary>], iteration_bounds = array<i64: 2, 9>, scalar_prefetch = 0 : i64, scratch_operands = 1 : i64, tpu.core_type = #tpu.core_type<tc>, window_params = [{transform_indices = @transform_0, window_bounds = array<i64: 1, 24, 128>}, {transform_indices = @transform_1, window_bounds = array<i64: 1, 128, 256>}, {pipeline_mode = #tpu.pipeline_mode<synchronous>, transform_indices = @transform_2, window_bounds = array<i64: 1, 256>}, {pipeline_mode = #tpu.pipeline_mode<synchronous>, transform_indices = @transform_3, window_bounds = array<i64: 128, 256>}, {pipeline_mode = #tpu.pipeline_mode<synchronous>, transform_indices = @transform_4, window_bounds = array<i64: 128, 256>}, {pipeline_mode = #tpu.pipeline_mode<synchronous>, transform_indices = @transform_5, window_bounds = array<i64: 1, 256>}, {transform_indices = @transform_6, window_bounds = array<i64: 1, 1, 128>}]} {
    %c0_i32 = arith.constant 0 : i32
    %0 = arith.cmpi eq, %arg1, %c0_i32 : i32
    %1 = arith.extui %0 : i1 to i32
    %c0_i32_0 = arith.constant 0 : i32
    %2 = arith.cmpi ne, %1, %c0_i32_0 : i32
    scf.if %2 {
      %cst_10 = arith.constant 0.000000e+00 : f32
      %16 = vector.broadcast %cst_10 : f32 to vector<16x256xf32>
      %c0_11 = arith.constant 0 : index
      %c0_12 = arith.constant 0 : index
      %17 = vector.load %arg9[%c0_11, %c0_12] : memref<16x256xf32, #tpu.memory_space<vmem>>, vector<16x256xf32>
      tpu.vector_store %arg9[%c0_11, %c0_12], %16 {strides = array<i32>} : memref<16x256xf32, #tpu.memory_space<vmem>>, vector<16x256xf32>,
    } else {
    }
    %c0 = arith.constant 0 : index
    %3 = arith.index_cast %arg1 : i32 to index
    %c0_1 = arith.constant 0 : index
    %4 = vector.load %arg2[%c0, %3, %c0_1] : memref<1x24x128xf32, #tpu.memory_space<vmem>>, vector<1x16x128xf32>
    %5 = vector.shape_cast %4 : vector<1x16x128xf32> to vector<16x128xf32>
    %6 = arith.truncf %5 : vector<16x128xf32> to vector<16x128xbf16>
    %c0_2 = arith.constant 0 : index
    %c0_3 = arith.constant 0 : index
    %7 = vector.load %arg9[%c0_2, %c0_3] : memref<16x256xf32, #tpu.memory_space<vmem>>, vector<16x256xf32>
    %c0_4 = arith.constant 0 : index
    %c0_5 = arith.constant 0 : index
    %c0_6 = arith.constant 0 : index
    %8 = vector.load %arg3[%c0_4, %c0_5, %c0_6] : memref<1x128x256xbf16, #tpu.memory_space<vmem>>, vector<1x128x256xbf16>
    %9 = vector.shape_cast %8 : vector<1x128x256xbf16> to vector<128x256xbf16>
    %cst = arith.constant dense<0.000000e+00> : vector<16x256xf32>
    %10 = tpu.matmul %6, %9, %cst {dimension_numbers = #tpu.dot_dimension_numbers<[1], [0], [0], [1], [0, 0, 1, 1], [], []>} : vector<16x128xbf16>, vector<128x256xbf16>, vector<16x256xf32> -> vector<16x256xf32>
    %11 = arith.addf %7, %10 : vector<16x256xf32>
    %c0_7 = arith.constant 0 : index
    %c0_8 = arith.constant 0 : index
    %12 = vector.load %arg9[%c0_7, %c0_8] : memref<16x256xf32, #tpu.memory_space<vmem>>, vector<16x256xf32>
    tpu.vector_store %arg9[%c0_7, %c0_8], %11 {strides = array<i32>} : memref<16x256xf32, #tpu.memory_space<vmem>>, vector<16x256xf32>,
    %c8_i32 = arith.constant 8 : i32
    %13 = arith.cmpi eq, %arg1, %c8_i32 : i32
    %14 = arith.extui %13 : i1 to i32
    %c0_i32_9 = arith.constant 0 : i32
    %15 = arith.cmpi ne, %14, %c0_i32_9 : i32
    scf.if %15 {
      %c0_10 = arith.constant 0 : index
      %c0_11 = arith.constant 0 : index
      %16 = vector.load %arg9[%c0_10, %c0_11] : memref<16x256xf32, #tpu.memory_space<vmem>>, vector<16x256xf32>
      %c0_12 = arith.constant 0 : index
      %c0_13 = arith.constant 0 : index
      %17 = vector.load %arg4[%c0_12, %c0_13] : memref<1x256xf32, #tpu.memory_space<vmem>>, vector<1x256xf32>
      %18 = vector.broadcast %17 : vector<1x256xf32> to vector<16x256xf32>
      %19 = arith.addf %16, %18 : vector<16x256xf32>
      %20 = vector.extract_strided_slice %19 {offsets = [0, 0], sizes = [16, 128], strides = [1, 1]} : vector<16x256xf32> to vector<16x128xf32>
      %21 = vector.extract_strided_slice %19 {offsets = [0, 128], sizes = [16, 128], strides = [1, 1]} : vector<16x256xf32> to vector<16x128xf32>
      %c0_14 = arith.constant 0 : index
      %c4 = arith.constant 4 : index
      %c0_15 = arith.constant 0 : index
      %22 = vector.load %arg2[%c0_14, %c4, %c0_15] : memref<1x24x128xf32, #tpu.memory_space<vmem>>, vector<1x16x1xf32>
      %23 = vector.shape_cast %22 : vector<1x16x1xf32> to vector<16x1xf32>
      %cst_16 = arith.constant 0.000000e+00 : f32
      %24 = vector.broadcast %cst_16 : f32 to vector<16x1xf32>
      %25 = arith.cmpf one, %23, %24 : vector<16x1xf32>
      %cst_17 = arith.constant -1.000000e+09 : f32
      %26 = vector.shape_cast %25 : vector<16x1xi1> to vector<16x1xi1>
      %27 = vector.broadcast %26 : vector<16x1xi1> to vector<16x128xi1>
      %28 = vector.broadcast %cst_17 : f32 to vector<16x128xf32>
      %29 = arith.select %27, %21, %28 : vector<16x128xi1>, vector<16x128xf32>
      %cst_18 = arith.constant dense<0xFF800000> : vector<128xf32>
      %30 = vector.multi_reduction <maximumf>, %29, %cst_18 [0] : vector<16x128xf32> to vector<128xf32>
      %31 = vector.shape_cast %30 : vector<128xf32> to vector<1x128xf32>
      %32 = vector.broadcast %31 : vector<1x128xf32> to vector<16x128xf32>
      %33 = arith.subf %29, %32 : vector<16x128xf32>
      %34 = math.exp %33 : vector<16x128xf32>
      %cst_19 = arith.constant dense<0.000000e+00> : vector<128xf32>
      %35 = vector.multi_reduction <add>, %34, %cst_19 [0] : vector<16x128xf32> to vector<128xf32>
      %36 = vector.shape_cast %35 : vector<128xf32> to vector<1x128xf32>
      %37 = tpu.reciprocal %36 {approx = true} : vector<1x128xf32> -> vector<1x128xf32>
      %38 = vector.broadcast %37 : vector<1x128xf32> to vector<16x128xf32>
      %39 = arith.mulf %34, %38 : vector<16x128xf32>
      %40 = arith.mulf %20, %39 : vector<16x128xf32>
      %cst_20 = arith.constant dense<0.000000e+00> : vector<128xf32>
      %41 = vector.multi_reduction <add>, %40, %cst_20 [0] : vector<16x128xf32> to vector<128xf32>
      %42 = vector.shape_cast %41 : vector<128xf32> to vector<1x128xf32>
      %cst_21 = arith.constant dense<0xFF800000> : vector<128xf32>
      %43 = vector.multi_reduction <maximumf>, %20, %cst_21 [0] : vector<16x128xf32> to vector<128xf32>
      %44 = vector.shape_cast %43 : vector<128xf32> to vector<1x128xf32>
      %45 = arith.truncf %42 : vector<1x128xf32> to vector<1x128xbf16>
      %c0_22 = arith.constant 0 : index
      %c0_23 = arith.constant 0 : index
      %46 = vector.load %arg5[%c0_22, %c0_23] : memref<128x256xbf16, #tpu.memory_space<vmem>>, vector<128x256xbf16>
      %cst_24 = arith.constant dense<0.000000e+00> : vector<1x256xf32>
      %47 = tpu.matmul %45, %46, %cst_24 {dimension_numbers = #tpu.dot_dimension_numbers<[1], [0], [0], [1], [0, 0, 1, 1], [], []>} : vector<1x128xbf16>, vector<128x256xbf16>, vector<1x256xf32> -> vector<1x256xf32>
      %48 = arith.truncf %44 : vector<1x128xf32> to vector<1x128xbf16>
      %c0_25 = arith.constant 0 : index
      %c0_26 = arith.constant 0 : index
      %49 = vector.load %arg6[%c0_25, %c0_26] : memref<128x256xbf16, #tpu.memory_space<vmem>>, vector<128x256xbf16>
      %cst_27 = arith.constant dense<0.000000e+00> : vector<1x256xf32>
      %50 = tpu.matmul %48, %49, %cst_27 {dimension_numbers = #tpu.dot_dimension_numbers<[1], [0], [0], [1], [0, 0, 1, 1], [], []>} : vector<1x128xbf16>, vector<128x256xbf16>, vector<1x256xf32> -> vector<1x256xf32>
      %51 = arith.addf %47, %50 : vector<1x256xf32>
      %c0_28 = arith.constant 0 : index
      %c0_29 = arith.constant 0 : index
      %52 = vector.load %arg7[%c0_28, %c0_29] : memref<1x256xf32, #tpu.memory_space<vmem>>, vector<1x256xf32>
      %53 = arith.addf %51, %52 : vector<1x256xf32>
      %54 = vector.extract_strided_slice %53 {offsets = [0, 0], sizes = [1, 128], strides = [1, 1]} : vector<1x256xf32> to vector<1x128xf32>
      %55 = vector.extract_strided_slice %53 {offsets = [0, 128], sizes = [1, 128], strides = [1, 1]} : vector<1x256xf32> to vector<1x128xf32>
      %cst_30 = arith.constant 0.000000e+00 : f32
      %56 = vector.broadcast %cst_30 : f32 to vector<1x128xf32>
      %57 = arith.subf %56, %55 : vector<1x128xf32>
      %58 = math.exp %57 : vector<1x128xf32>
      %cst_31 = arith.constant 1.000000e+00 : f32
      %59 = vector.broadcast %cst_31 : f32 to vector<1x128xf32>
      %60 = arith.addf %59, %58 : vector<1x128xf32>
      %61 = tpu.reciprocal %60 {approx = true} : vector<1x128xf32> -> vector<1x128xf32>
      %62 = arith.mulf %54, %61 : vector<1x128xf32>
      %c0_32 = arith.constant 0 : index
      %c0_33 = arith.constant 0 : index
      %c0_34 = arith.constant 0 : index
      %63 = vector.load %arg8[%c0_32, %c0_33, %c0_34] : memref<1x1x128xf32, #tpu.memory_space<vmem>>, vector<1x1x128xf32>
      %64 = vector.shape_cast %63 : vector<1x1x128xf32> to vector<1x128xf32>
      %65 = vector.shape_cast %62 : vector<1x128xf32> to vector<1x1x128xf32>
      tpu.vector_store %arg8[%c0_32, %c0_33, %c0_34], %65 {strides = array<i32>} : memref<1x1x128xf32, #tpu.memory_space<vmem>>, vector<1x1x128xf32>,
    } else {
    }
    return
  }
  func.func @transform_0(%arg0: i32, %arg1: i32) -> (i32, i32, i32) {
    %c0_i32 = arith.constant 0 : i32
    %c0_i32_0 = arith.constant 0 : i32
    %c0_i32_1 = arith.constant 0 : i32
    return %arg0, %c0_i32, %c0_i32_0 : i32, i32, i32
  }
  func.func @transform_1(%arg0: i32, %arg1: i32) -> (i32, i32, i32) {
    %c0_i32 = arith.constant 0 : i32
    %c0_i32_0 = arith.constant 0 : i32
    %c0_i32_1 = arith.constant 0 : i32
    return %arg1, %c0_i32, %c0_i32_0 : i32, i32, i32
  }
  func.func @transform_2(%arg0: i32, %arg1: i32) -> (i32, i32) {
    %c0_i32 = arith.constant 0 : i32
    %c0_i32_0 = arith.constant 0 : i32
    %c0_i32_1 = arith.constant 0 : i32
    return %c0_i32, %c0_i32_0 : i32, i32
  }
  func.func @transform_3(%arg0: i32, %arg1: i32) -> (i32, i32) {
    %c0_i32 = arith.constant 0 : i32
    %c0_i32_0 = arith.constant 0 : i32
    %c0_i32_1 = arith.constant 0 : i32
    return %c0_i32, %c0_i32_0 : i32, i32
  }
  func.func @transform_4(%arg0: i32, %arg1: i32) -> (i32, i32) {
    %c0_i32 = arith.constant 0 : i32
    %c0_i32_0 = arith.constant 0 : i32
    %c0_i32_1 = arith.constant 0 : i32
    return %c0_i32, %c0_i32_0 : i32, i32
  }
  func.func @transform_5(%arg0: i32, %arg1: i32) -> (i32, i32) {
    %c0_i32 = arith.constant 0 : i32
    %c0_i32_0 = arith.constant 0 : i32
    %c0_i32_1 = arith.constant 0 : i32
    return %c0_i32, %c0_i32_0 : i32, i32
  }
  func.func @transform_6(%arg0: i32, %arg1: i32) -> (i32, i32, i32) {
    %c0_i32 = arith.constant 0 : i32
    %c0_i32_0 = arith.constant 0 : i32
    %c0_i32_1 = arith.constant 0 : i32
    return %arg0, %c0_i32, %c0_i32_0 : i32, i32, i32
  }
}

</mosaic_0001>

<llo_original>
// kernel: light_attention_forward.1
$region0: #{light_attention_forward.1}
  #allocation0 [shape = 'u32[]', space=smem, size = 0x4, offset = 0x4, fixed_abs, tag = 'smem constant byte address 0x4 - core index']
  #allocation1 [shape = 'u32[144,128]{1,0:T(1,128)}', space=vmem, size = 0x12000, scoped, tag = 'internal scratch']
  #allocation2 [shape = 'f32[16,256]{1,0:T(8,128)}', space=vmem, size = 0x4000, scoped, tag = 'scratch operand']
  %s0 = inlined_call_operand.vmem [shape: f32[2,24,128], index: 0, kind: input, shape index: {}]
  %s1 = inlined_call_operand.vmem [shape: bf16[9,128,256], index: 1, kind: input, shape index: {}]
  %s2 = inlined_call_operand.vmem [shape: f32[1,256], index: 2, kind: input, shape index: {}]
  %s3 = inlined_call_operand.vmem [shape: bf16[128,256], index: 3, kind: input, shape index: {}]
  %s4 = inlined_call_operand.vmem [shape: bf16[128,256], index: 4, kind: input, shape index: {}]
  %s5 = inlined_call_operand.vmem [shape: f32[1,256], index: 5, kind: input, shape index: {}]
  %s6 = inlined_call_operand.hbm [shape: f32[2,1,128], index: 6, kind: output, shape index: {}]
  %s7 = sld [smem:[#allocation0]]
  $region65: #{light_attention_forward.1} parent=0
    _
  %s9 = ssub.s32 1, %s7
  %s10 = scalar_select 0, %s9, %s7
  $region1: #{light_attention_forward.1} parent=0
    #allocation3 [shape = 'u8[1024]{0}', space=vmem, size = 0x400, scoped, tag = 'output window, operand 0']
    #allocation4 [shape = 's32[2]{0}', space=sflag, size = 0x8, scoped, tag = 'scoped memory for light_attention_forward.1']
    %11 = vsyncpa [#allocation4], 0
    %s12 = scalar_lea.sflag [#allocation4], 1
    %13 = vsyncpa %s12, 0
    loop: start=0, step=1, limit=20
    $region2: #{light_attention_forward.1} parent=1 // loop_pre_header
      _
    $region3: #{light_attention_forward.1} parent=1 // loop_header
      %s15 = sphi 0, %s19
      %p16 = scmp.ge.s32.totalorder %s15, 20
      %s22 = sphi 0, %s34
      %s23 = sphi 0, %s30
      %s24 = sphi 0, %s22
      %s25 = sphi 0, %s23
      %s26 = sphi 0, %s24
      %s27 = sphi 0, %s25
      %s37 = sphi 0, %s39
      %s40 = sphi 0, %s37
      %s41 = sphi 0, %s40
      %s57 = sphi 0, %s41
      %s63 = sphi 0, %s65
      %s66 = sphi 0, %s63
      %s67 = sphi 0, %s66
      %s83 = sphi 0, %s67
      %s87 = sphi 0, %s87
      %s89 = sphi 0, %s87
      %s90 = sphi 0, %s89
      %s104 = sphi 0, %s90
      %s108 = sphi 0, %s108
      %s110 = sphi 0, %s108
      %s111 = sphi 0, %s110
      %s125 = sphi 0, %s111
      %s129 = sphi 0, %s129
      %s131 = sphi 0, %s129
      %s132 = sphi 0, %s131
      %s146 = sphi 0, %s132
      %s150 = sphi 0, %s150
      %s152 = sphi 0, %s150
      %s153 = sphi 0, %s152
      %s167 = sphi 0, %s153
      %s173 = sphi 0, %s175
      %s176 = sphi 0, %s173
      %s177 = sphi 0, %s176
      %s193 = sphi 0, %s177
    $region4: #{light_attention_forward.1} parent=1 // loop_header_branch
      %18 = sbr.rel (%p16) target = $region8
    $region5: #{light_attention_forward.1} parent=1 // loop_body
      %s20 = ssub.s32 %s15, 1
      %s21 = ssub.s32 %s15, 2
      %s28 = sadd.s32 1, %s23
      %p29 = scmp.ge.s32.totalorder %s28, 9
      %s30 = scalar_select %p29, 0, %s28
      %s31 = sadd.s32 1, %s22
      %s32 = scalar_select %p29, %s31, %s22
      %p33 = scmp.ge.s32.totalorder %s32, 2
      %s34 = scalar_select %p33, 0, %s32
      %s35 = ssub.s32 %s22, %s34
      %p36 = scmp.eq.s32.totalorder %s35, 0
      %s38 = sadd.s32 %s37, 1
      %s39 = scalar_select %p36, %s37, %s38
      %p42 = pneg %p36
      %p43 = scmp.eq.s32.totalorder %s15, 17
      %p44 = por %p42, %p43
      %p45 = scmp.ne.s32.totalorder %s37, %s40
      %p46 = scmp.eq.s32.totalorder %s15, 0
      %p47 = por %p45, %p46
      %p48 = scmp.ne.s32.totalorder %s37, %s40
      %p49 = scmp.eq.s32.totalorder %s20, 17
      %p50 = por %p48, %p49
      %p51 = scmp.ne.s32.totalorder %s40, %s41
      %p52 = scmp.eq.s32.totalorder %s20, 0
      %p53 = por %p51, %p52
      %p54 = scmp.ne.s32.totalorder %s40, %s41
      %p55 = scmp.eq.s32.totalorder %s21, 17
      %p56 = por %p54, %p55
      %p58 = scmp.ne.s32.totalorder %s41, %s57
      %p59 = scmp.eq.s32.totalorder %s21, 0
      %p60 = por %p58, %p59
      %s61 = ssub.s32 %s23, %s30
      %p62 = scmp.eq.s32.totalorder %s61, 0
      %s64 = sadd.s32 %s63, 1
      %s65 = scalar_select %p62, %s63, %s64
      %p68 = pneg %p62
      %p69 = scmp.eq.s32.totalorder %s15, 17
      %p70 = por %p68, %p69
      %p71 = scmp.ne.s32.totalorder %s63, %s66
      %p72 = scmp.eq.s32.totalorder %s15, 0
      %p73 = por %p71, %p72
      %p74 = scmp.ne.s32.totalorder %s63, %s66
      %p75 = scmp.eq.s32.totalorder %s20, 17
      %p76 = por %p74, %p75
      %p77 = scmp.ne.s32.totalorder %s66, %s67
      %p78 = scmp.eq.s32.totalorder %s20, 0
      %p79 = por %p77, %p78
      %p80 = scmp.ne.s32.totalorder %s66, %s67
      %p81 = scmp.eq.s32.totalorder %s21, 17
      %p82 = por %p80, %p81
      %p84 = scmp.ne.s32.totalorder %s67, %s83
      %p85 = scmp.eq.s32.totalorder %s21, 0
      %p86 = por %p84, %p85
      %s88 = sadd.s32 %s87, 1
      %p91 = scmp.eq.s32.totalorder %s15, 17
      %p92 = scmp.ne.s32.totalorder %s87, %s89
      %p93 = scmp.eq.s32.totalorder %s15, 0
      %p94 = por %p92, %p93
      %p95 = scmp.ne.s32.totalorder %s87, %s89
      %p96 = scmp.eq.s32.totalorder %s20, 17
      %p97 = por %p95, %p96
      %p98 = scmp.ne.s32.totalorder %s89, %s90
      %p99 = scmp.eq.s32.totalorder %s20, 0
      %p100 = por %p98, %p99
      %p101 = scmp.ne.s32.totalorder %s89, %s90
      %p102 = scmp.eq.s32.totalorder %s21, 17
      %p103 = por %p101, %p102
      %p105 = scmp.ne.s32.totalorder %s90, %s104
      %p106 = scmp.eq.s32.totalorder %s21, 0
      %p107 = por %p105, %p106
      %s109 = sadd.s32 %s108, 1
      %p112 = scmp.eq.s32.totalorder %s15, 17
      %p113 = scmp.ne.s32.totalorder %s108, %s110
      %p114 = scmp.eq.s32.totalorder %s15, 0
      %p115 = por %p113, %p114
      %p116 = scmp.ne.s32.totalorder %s108, %s110
      %p117 = scmp.eq.s32.totalorder %s20, 17
      %p118 = por %p116, %p117
      %p119 = scmp.ne.s32.totalorder %s110, %s111
      %p120 = scmp.eq.s32.totalorder %s20, 0
      %p121 = por %p119, %p120
      %p122 = scmp.ne.s32.totalorder %s110, %s111
      %p123 = scmp.eq.s32.totalorder %s21, 17
      %p124 = por %p122, %p123
      %p126 = scmp.ne.s32.totalorder %s111, %s125
      %p127 = scmp.eq.s32.totalorder %s21, 0
      %p128 = por %p126, %p127
      %s130 = sadd.s32 %s129, 1
      %p133 = scmp.eq.s32.totalorder %s15, 17
      %p134 = scmp.ne.s32.totalorder %s129, %s131
      %p135 = scmp.eq.s32.totalorder %s15, 0
      %p136 = por %p134, %p135
      %p137 = scmp.ne.s32.totalorder %s129, %s131
      %p138 = scmp.eq.s32.totalorder %s20, 17
      %p139 = por %p137, %p138
      %p140 = scmp.ne.s32.totalorder %s131, %s132
      %p141 = scmp.eq.s32.totalorder %s20, 0
      %p142 = por %p140, %p141
      %p143 = scmp.ne.s32.totalorder %s131, %s132
      %p144 = scmp.eq.s32.totalorder %s21, 17
      %p145 = por %p143, %p144
      %p147 = scmp.ne.s32.totalorder %s132, %s146
      %p148 = scmp.eq.s32.totalorder %s21, 0
      %p149 = por %p147, %p148
      %s151 = sadd.s32 %s150, 1
      %p154 = scmp.eq.s32.totalorder %s15, 17
      %p155 = scmp.ne.s32.totalorder %s150, %s152
      %p156 = scmp.eq.s32.totalorder %s15, 0
      %p157 = por %p155, %p156
      %p158 = scmp.ne.s32.totalorder %s150, %s152
      %p159 = scmp.eq.s32.totalorder %s20, 17
      %p160 = por %p158, %p159
      %p161 = scmp.ne.s32.totalorder %s152, %s153
      %p162 = scmp.eq.s32.totalorder %s20, 0
      %p163 = por %p161, %p162
      %p164 = scmp.ne.s32.totalorder %s152, %s153
      %p165 = scmp.eq.s32.totalorder %s21, 17
      %p166 = por %p164, %p165
      %p168 = scmp.ne.s32.totalorder %s153, %s167
      %p169 = scmp.eq.s32.totalorder %s21, 0
      %p170 = por %p168, %p169
      %s171 = ssub.s32 %s22, %s34
      %p172 = scmp.eq.s32.totalorder %s171, 0
      %s174 = sadd.s32 %s173, 1
      %s175 = scalar_select %p172, %s173, %s174
      %p178 = pneg %p172
      %p179 = scmp.eq.s32.totalorder %s15, 17
      %p180 = por %p178, %p179
      %p181 = scmp.ne.s32.totalorder %s173, %s176
      %p182 = scmp.eq.s32.totalorder %s15, 0
      %p183 = por %p181, %p182
      %p184 = scmp.ne.s32.totalorder %s173, %s176
      %p185 = scmp.eq.s32.totalorder %s20, 17
      %p186 = por %p184, %p185
      %p187 = scmp.ne.s32.totalorder %s176, %s177
      %p188 = scmp.eq.s32.totalorder %s20, 0
      %p189 = por %p187, %p188
      %p190 = scmp.ne.s32.totalorder %s176, %s177
      %p191 = scmp.eq.s32.totalorder %s21, 17
      %p192 = por %p190, %p191
      %p194 = scmp.ne.s32.totalorder %s177, %s193
      %p195 = scmp.eq.s32.totalorder %s21, 0
      %p196 = por %p194, %p195
      %p197 = scmp.le.s32.totalorder 1, %s15
      %p198 = scmp.lt.s32.totalorder %s15, 19
      %p199 = pnand %p197, %p198
      %p200 = pneg %p199
      // Predicated region
      $region9: #{light_attention_forward.1} parent=5 // pred_check
        _
      $region10: #{light_attention_forward.1} parent=5 // pred_check_branch
        %202 = sbr.rel (%p199) target = $region12
      $region11: #{light_attention_forward.1} parent=5 // pred_region
        %s203 = ssub.s32 %s15, 1
        // Predicated region
        $region13: #{light_attention_forward.1} parent=11 // pred_check
          %p204 = pneg %p100
        $region14: #{light_attention_forward.1} parent=11 // pred_check_branch
          %206 = sbr.rel (%p204) target = $region16
        $region15: #{light_attention_forward.1} parent=11 // pred_region
          _
        $region16: #{light_attention_forward.1} parent=11 // pred_fallthru
          _
        // Predicated region
        $region17: #{light_attention_forward.1} parent=11 // pred_check
          %p207 = pneg %p121
        $region18: #{light_attention_forward.1} parent=11 // pred_check_branch
          %209 = sbr.rel (%p207) target = $region20
        $region19: #{light_attention_forward.1} parent=11 // pred_region
          _
        $region20: #{light_attention_forward.1} parent=11 // pred_fallthru
          _
        // Predicated region
        $region21: #{light_attention_forward.1} parent=11 // pred_check
          %p210 = pneg %p142
        $region22: #{light_attention_forward.1} parent=11 // pred_check_branch
          %212 = sbr.rel (%p210) target = $region24
        $region23: #{light_attention_forward.1} parent=11 // pred_region
          _
        $region24: #{light_attention_forward.1} parent=11 // pred_fallthru
          _
        // Predicated region
        $region25: #{light_attention_forward.1} parent=11 // pred_check
          %p213 = pneg %p163
        $region26: #{light_attention_forward.1} parent=11 // pred_check_branch
          %215 = sbr.rel (%p213) target = $region28
        $region27: #{light_attention_forward.1} parent=11 // pred_region
          _
        $region28: #{light_attention_forward.1} parent=11 // pred_fallthru
          _
      $region12: #{light_attention_forward.1} parent=5 // pred_fallthru
        _
      %p216 = scmp.lt.s32.totalorder %s15, 18
      // Predicated region
      $region29: #{light_attention_forward.1} parent=5 // pred_check
        %p217 = pneg %p216
      $region30: #{light_attention_forward.1} parent=5 // pred_check_branch
        %219 = sbr.rel (%p217) target = $region32
      $region31: #{light_attention_forward.1} parent=5 // pred_region
        // Predicated region
        $region33: #{light_attention_forward.1} parent=31 // pred_check
          %p220 = pneg %p47
        $region34: #{light_attention_forward.1} parent=31 // pred_check_branch
          %222 = sbr.rel (%p220) target = $region36
        $region35: #{light_attention_forward.1} parent=31 // pred_region
          %p223 = scmp.lt.s32.totalorder %s22, 1
          %s224 = scalar_select %p223, %s22, 1
          %s225 = smul.addr %s224, 3
          %s226 = smul.addr %s225, 8
          %s227 = scalar_lea.vmem %s0, %s226
        $region36: #{light_attention_forward.1} parent=31 // pred_fallthru
          _
        // Predicated region
        $region37: #{light_attention_forward.1} parent=31 // pred_check
          %p228 = pneg %p73
        $region38: #{light_attention_forward.1} parent=31 // pred_check_branch
          %230 = sbr.rel (%p228) target = $region40
        $region39: #{light_attention_forward.1} parent=31 // pred_region
          %p231 = scmp.lt.s32.totalorder %s23, 8
          %s232 = scalar_select %p231, %s23, 8
          %s233 = smul.addr %s232, 32
          %s234 = smul.addr %s233, 4
          %s235 = scalar_lea.vmem %s1, %s234
        $region40: #{light_attention_forward.1} parent=31 // pred_fallthru
          _
      $region32: #{light_attention_forward.1} parent=5 // pred_fallthru
        _
      %p236 = scmp.le.s32.totalorder 1, %s15
      %p237 = scmp.lt.s32.totalorder %s15, 19
      %p238 = pnand %p236, %p237
      %p239 = pneg %p238
      // Predicated region
      $region41: #{light_attention_forward.1} parent=5 // pred_check
        _
      $region42: #{light_attention_forward.1} parent=5 // pred_check_branch
        %241 = sbr.rel (%p238) target = $region44
      $region43: #{light_attention_forward.1} parent=5 // pred_region
        %s242 = ssub.s32 %s15, 1
        %p243 = scmp.lt.s32.totalorder %s24, 1
        %s244 = scalar_select %p243, %s24, 1
        %s245 = smul.addr %s244, 3
        %s246 = smul.addr %s245, 8
        %s247 = scalar_lea.vmem %s0, %s246
        %p248 = pneg %p53
        %p249 = pneg %p50
        %p250 = scmp.lt.s32.totalorder %s25, 8
        %s251 = scalar_select %p250, %s25, 8
        %s252 = smul.addr %s251, 32
        %s253 = smul.addr %s252, 4
        %s254 = scalar_lea.vmem %s1, %s253
        %p255 = pneg %p79
        %p256 = pneg %p76
        %p257 = pneg %p100
        %p258 = pneg %p97
        %p259 = pneg %p121
        %p260 = pneg %p118
        %p261 = pneg %p142
        %p262 = pneg %p139
        %p263 = pneg %p163
        %p264 = pneg %p160
        %p265 = pneg %p189
        %p266 = pneg %p186
        %s267 = sand.u32 %s176, 1
        %s268 = scalar_lea.sflag [#allocation4], %s267
        %s269 = sand.u32 %s176, 1
        %s270 = scalar_lea.vmem [#allocation3], %s269
        %p271 = scmp.lt.s32.totalorder %s24, 1
        %s272 = scalar_select %p271, %s24, 1
        %s273 = smul.addr %s272, 3
        %s274 = smul.addr %s273, 8
        %s275 = scalar_lea.vmem %s0, %s274
        %p276 = scmp.lt.s32.totalorder %s25, 8
        %s277 = scalar_select %p276, %s25, 8
        %s278 = smul.addr %s277, 32
        %s279 = smul.addr %s278, 4
        %s280 = scalar_lea.vmem %s1, %s279
        %p282 = scmp.eq.s32.totalorder %s25, 0
        // Predicated region
        $region45: #{light_attention_forward.1} parent=43 // pred_check
          %p283 = pneg %p282
        $region46: #{light_attention_forward.1} parent=43 // pred_check_branch
          %285 = sbr.rel (%p283) target = $region48
        $region47: #{light_attention_forward.1} parent=43 // pred_region
          %286 = vst [vmem:[#allocation2] sm:$0xff] 0.0
          %287 = vst [vmem:[#allocation2 + $0x8] sm:$0xff] 0.0
          %288 = vst [vmem:[#allocation2 + $0x10] sm:$0xff] 0.0
          %289 = vst [vmem:[#allocation2 + $0x18] sm:$0xff] 0.0
        $region48: #{light_attention_forward.1} parent=43 // pred_fallthru
          _
        %s290 = scalar_lea.vmem %s275, %s25
        %v291 = vld [vmem:[%s290] sm:$0xff]
        %v292 = vld [vmem:[%s290 + $0x8] sm:$0xff]
        %v293 = vpack.c.bf16 %v292, %v291
        %v294 = vld [vmem:[#allocation2] sm:$0xff]
        %v295 = vld [vmem:[#allocation2 + $0x8] sm:$0xff]
        %v296 = vld [vmem:[#allocation2 + $0x10] sm:$0xff]
        %v297 = vld [vmem:[#allocation2 + $0x18] sm:$0xff]
        %v298 = vld [vmem:[%s280] sm:$0xff]
        %v299 = vld [vmem:[%s280 + $0x8] sm:$0xff]
        %v300 = vld [vmem:[%s280 + $0x10] sm:$0xff]
        %v301 = vld [vmem:[%s280 + $0x18] sm:$0xff]
        %v302 = vld [vmem:[%s280 + $0x20] sm:$0xff]
        %v303 = vld [vmem:[%s280 + $0x28] sm:$0xff]
        %v304 = vld [vmem:[%s280 + $0x30] sm:$0xff]
        %v305 = vld [vmem:[%s280 + $0x38] sm:$0xff]
        %v306 = vld [vmem:[%s280 + $0x40] sm:$0xff]
        %v307 = vld [vmem:[%s280 + $0x48] sm:$0xff]
        %v308 = vld [vmem:[%s280 + $0x50] sm:$0xff]
        %v309 = vld [vmem:[%s280 + $0x58] sm:$0xff]
        %v310 = vld [vmem:[%s280 + $0x60] sm:$0xff]
        %v311 = vld [vmem:[%s280 + $0x68] sm:$0xff]
        %v312 = vld [vmem:[%s280 + $0x70] sm:$0xff]
        %v313 = vld [vmem:[%s280 + $0x78] sm:$0xff]
        %v330 = vunpack.c.l.b16 %v298
        %v331 = vunpack.c.h.b16 %v298
        %v332 = vunpack.c.l.b16 %v299
        %v333 = vunpack.c.h.b16 %v299
        %v334 = vunpack.c.l.b16 %v300
        %v335 = vunpack.c.h.b16 %v300
        %v336 = vunpack.c.l.b16 %v301
        %v337 = vunpack.c.h.b16 %v301
        %v338 = vunpack.c.l.b16 %v302
        %v339 = vunpack.c.h.b16 %v302
        %v340 = vunpack.c.l.b16 %v303
        %v341 = vunpack.c.h.b16 %v303
        %v342 = vunpack.c.l.b16 %v304
        %v343 = vunpack.c.h.b16 %v304
        %v344 = vunpack.c.l.b16 %v305
        %v345 = vunpack.c.h.b16 %v305
        %v346 = vunpack.c.l.b16 %v306
        %v347 = vunpack.c.h.b16 %v306
        %v348 = vunpack.c.l.b16 %v307
        %v349 = vunpack.c.h.b16 %v307
        %v350 = vunpack.c.l.b16 %v308
        %v351 = vunpack.c.h.b16 %v308
        %v352 = vunpack.c.l.b16 %v309
        %v353 = vunpack.c.h.b16 %v309
        %v354 = vunpack.c.l.b16 %v310
        %v355 = vunpack.c.h.b16 %v310
        %v356 = vunpack.c.l.b16 %v311
        %v357 = vunpack.c.h.b16 %v311
        %v358 = vunpack.c.l.b16 %v312
        %v359 = vunpack.c.h.b16 %v312
        %v360 = vunpack.c.l.b16 %v313
        %v361 = vunpack.c.h.b16 %v313
        %v362 = vpack.c.b16 %v332, %v330
        %v363 = vpack.c.b16 %v333, %v331
        %v364 = vpack.c.b16 %v336, %v334
        %v365 = vpack.c.b16 %v337, %v335
        %v366 = vpack.c.b16 %v340, %v338
        %v367 = vpack.c.b16 %v341, %v339
        %v368 = vpack.c.b16 %v344, %v342
        %v369 = vpack.c.b16 %v345, %v343
        %v370 = vpack.c.b16 %v348, %v346
        %v371 = vpack.c.b16 %v349, %v347
        %v372 = vpack.c.b16 %v352, %v350
        %v373 = vpack.c.b16 %v353, %v351
        %v374 = vpack.c.b16 %v356, %v354
        %v375 = vpack.c.b16 %v357, %v355
        %v376 = vpack.c.b16 %v360, %v358
        %v377 = vpack.c.b16 %v361, %v359
        %394 = vmatprep.subr.bf16.mxu0 %v363
        %395 = vmatpush1.bf16.msra.mxu0 %v362
        %396 = vmatprep.subr.bf16.mxu0 %v365
        %397 = vmatpush1.bf16.msra.mxu0 %v364
        %398 = vmatprep.subr.bf16.mxu0 %v367
        %399 = vmatpush1.bf16.msra.mxu0 %v366
        %400 = vmatprep.subr.bf16.mxu0 %v369
        %401 = vmatpush1.bf16.msra.mxu0 %v368
        %402 = vmatprep.subr.bf16.mxu0 %v371
        %403 = vmatpush1.bf16.msra.mxu0 %v370
        %404 = vmatprep.subr.bf16.mxu0 %v373
        %405 = vmatpush1.bf16.msra.mxu0 %v372
        %406 = vmatprep.subr.bf16.mxu0 %v375
        %407 = vmatpush1.bf16.msra.mxu0 %v374
        %408 = vmatprep.subr.bf16.mxu0 %v377
        %409 = vmatpush1.bf16.msra.mxu0 %v376
        %410 = vmatprep.subr.bf16.mxu0 0
        %411 = vmatpush1.bf16.msra.mxu0 0
        %412 = vmatprep.subr.bf16.mxu0 0
        %413 = vmatpush1.bf16.msra.mxu0 0
        %414 = vmatprep.subr.bf16.mxu0 0
        %415 = vmatpush1.bf16.msra.mxu0 0
        %416 = vmatprep.subr.bf16.mxu0 0
        %417 = vmatpush1.bf16.msra.mxu0 0
        %418 = vmatprep.subr.bf16.mxu0 0
        %419 = vmatpush1.bf16.msra.mxu0 0
        %420 = vmatprep.subr.bf16.mxu0 0
        %421 = vmatpush1.bf16.msra.mxu0 0
        %422 = vmatprep.subr.bf16.mxu0 0
        %423 = vmatpush1.bf16.msra.mxu0 0
        %424 = vmatprep.subr.bf16.mxu0 0
        %425 = vmatpush1.bf16.msra.mxu0 0
        %426 = vmatprep.mubr.bf16.mxu0 0
        %427 = vmatmul.mubr.bf16.gmra.mrb[0].mxu0 %v293
        %v428 = vpop.f32.mrb[0].mxu0
        %v429 = vadd.f32 0.0, %v428
        %v430 = vpop.f32.mrb[0].mxu0
        %v431 = vadd.f32 0.0, %v430
        %v432 = vpop.f32.mrb[0].mxu0
        %v433 = vadd.f32 0.0, %v432
        %v434 = vpop.f32.mrb[0].mxu0
        %v435 = vadd.f32 0.0, %v434
        %436 = vdwg.mxu0
        %v437 = vadd.f32 %v294, %v429
        %v438 = vadd.f32 %v295, %v431
        %v439 = vadd.f32 %v296, %v433
        %v440 = vadd.f32 %v297, %v435
        %441 = vst [vmem:[#allocation2] sm:$0xff] %v437
        %442 = vst [vmem:[#allocation2 + $0x8] sm:$0xff] %v438
        %443 = vst [vmem:[#allocation2 + $0x10] sm:$0xff] %v439
        %444 = vst [vmem:[#allocation2 + $0x18] sm:$0xff] %v440
        %p445 = scmp.eq.s32.totalorder %s25, 8
        // Predicated region
        $region49: #{light_attention_forward.1} parent=43 // pred_check
          %p446 = pneg %p445
        $region50: #{light_attention_forward.1} parent=43 // pred_check_branch
          %448 = sbr.rel (%p446) target = $region52
        $region51: #{light_attention_forward.1} parent=43 // pred_region
          %v449 = vld [vmem:[#allocation2] sm:$0xff]
          %v450 = vld [vmem:[#allocation2 + $0x8] sm:$0xff]
          %v451 = vld [vmem:[#allocation2 + $0x10] sm:$0xff]
          %v452 = vld [vmem:[#allocation2 + $0x18] sm:$0xff]
          %v453 = vld [vmem:[%s2] sm:$0x3]
          %v455 = vlaneseq
          %v456 = vshrl.u32 %v455, 7
          %v457 = vsub.s32 0, %v456
          %v458 = vrot.slane %v453, %v457
          %v459 = vlaneseq
          %v460 = vshrl.u32 %v459, 7
          %v461 = vsub.s32 1, %v460
          %v462 = vrot.slane %v453, %v461
          %v465 = vadd.f32 %v449, %v458
          %v466 = vadd.f32 %v450, %v462
          %v467 = vadd.f32 %v451, %v458
          %v468 = vadd.f32 %v452, %v462
          %v469 = vld [vmem:[%s275 + $0x4] sm:$0xff]
          %v470 = vld [vmem:[%s275 + $0xc] sm:$0xff]
          %vm471 = vcmp.ne.f32.partialorder %v469, 0.0
          %vm472 = vcmp.ne.f32.partialorder %v470, 0.0
          %v473 = vsel %vm471, 1, 0
          %v474 = vsel %vm472, 1, 0
          %475 = vset.pattern.permute.xlu0 0
          %476 = vperm.xlu0 %475, %v473
          %v477 = vpop.permute.xlu0 %476
          %478 = vset.pattern.permute.xlu0 0
          %479 = vperm.xlu0 %478, %v474
          %v480 = vpop.permute.xlu0 %479
          %vm481 = vcmp.eq.s32.totalorder %v477, 1
          %vm482 = vcmp.eq.s32.totalorder %v480, 1
          %v483 = vsel %vm481, %v466, -1e+09
          %v484 = vsel %vm482, %v468, -1e+09
          %v485 = vmax.f32 %v483, %v484
          %v486 = vrot.slane %v485, 4
          %v487 = vmax.f32 %v485, %v486
          %v488 = vrot.slane %v487, 2
          %v489 = vmax.f32 %v487, %v488
          %v490 = vrot.slane %v489, 1
          %v491 = vmax.f32 %v489, %v490
          %v492 = vsub.f32 %v483, %v491
          %v493 = vsub.f32 %v484, %v491
          %v494 = vmul.f32 %v492, 1.442695
          %v495 = vpow.pop %v494
          %v496 = vmul.f32 %v493, 1.442695
          %v497 = vpow.pop %v496
          %v498 = vadd.f32 %v495, %v497
          %v499 = vrot.slane %v498, 4
          %v500 = vadd.f32 %v498, %v499
          %v501 = vrot.slane %v500, 2
          %v502 = vadd.f32 %v500, %v501
          %v503 = vrot.slane %v502, 1
          %v504 = vadd.f32 %v502, %v503
          %v505 = vrcp.pop %v504
          %v506 = vmul.f32 %v495, %v505
          %v507 = vmul.f32 %v497, %v505
          %v508 = vmul.f32 %v465, %v506
          %v509 = vmul.f32 %v467, %v507
          %v510 = vadd.f32 %v508, %v509
          %v511 = vrot.slane %v510, 4
          %v512 = vadd.f32 %v510, %v511
          %v513 = vrot.slane %v512, 2
          %v514 = vadd.f32 %v512, %v513
          %v515 = vrot.slane %v514, 1
          %v516 = vadd.f32 %v514, %v515
          %v517 = vmax.f32 %v465, %v467
          %v518 = vrot.slane %v517, 4
          %v519 = vmax.f32 %v517, %v518
          %v520 = vrot.slane %v519, 2
          %v521 = vmax.f32 %v519, %v520
          %v522 = vrot.slane %v521, 1
          %v523 = vmax.f32 %v521, %v522
          %v524 = vpack.c.bf16 %v516, %v516
          %v525 = vld [vmem:[%s3] sm:$0xff]
          %v526 = vld [vmem:[%s3 + $0x8] sm:$0xff]
          %v527 = vld [vmem:[%s3 + $0x10] sm:$0xff]
          %v528 = vld [vmem:[%s3 + $0x18] sm:$0xff]
          %v529 = vld [vmem:[%s3 + $0x20] sm:$0xff]
          %v530 = vld [vmem:[%s3 + $0x28] sm:$0xff]
          %v531 = vld [vmem:[%s3 + $0x30] sm:$0xff]
          %v532 = vld [vmem:[%s3 + $0x38] sm:$0xff]
          %v533 = vld [vmem:[%s3 + $0x40] sm:$0xff]
          %v534 = vld [vmem:[%s3 + $0x48] sm:$0xff]
          %v535 = vld [vmem:[%s3 + $0x50] sm:$0xff]
          %v536 = vld [vmem:[%s3 + $0x58] sm:$0xff]
          %v537 = vld [vmem:[%s3 + $0x60] sm:$0xff]
          %v538 = vld [vmem:[%s3 + $0x68] sm:$0xff]
          %v539 = vld [vmem:[%s3 + $0x70] sm:$0xff]
          %v540 = vld [vmem:[%s3 + $0x78] sm:$0xff]
          %v541 = vpack.c.bf16 %v523, %v523
          %v542 = vld [vmem:[%s4] sm:$0xff]
          %v543 = vld [vmem:[%s4 + $0x8] sm:$0xff]
          %v544 = vld [vmem:[%s4 + $0x10] sm:$0xff]
          %v545 = vld [vmem:[%s4 + $0x18] sm:$0xff]
          %v546 = vld [vmem:[%s4 + $0x20] sm:$0xff]
          %v547 = vld [vmem:[%s4 + $0x28] sm:$0xff]
          %v548 = vld [vmem:[%s4 + $0x30] sm:$0xff]
          %v549 = vld [vmem:[%s4 + $0x38] sm:$0xff]
          %v550 = vld [vmem:[%s4 + $0x40] sm:$0xff]
          %v551 = vld [vmem:[%s4 + $0x48] sm:$0xff]
          %v552 = vld [vmem:[%s4 + $0x50] sm:$0xff]
          %v553 = vld [vmem:[%s4 + $0x58] sm:$0xff]
          %v554 = vld [vmem:[%s4 + $0x60] sm:$0xff]
          %v555 = vld [vmem:[%s4 + $0x68] sm:$0xff]
          %v556 = vld [vmem:[%s4 + $0x70] sm:$0xff]
          %v557 = vld [vmem:[%s4 + $0x78] sm:$0xff]
          %v574 = vunpack.c.l.b16 %v542
          %v575 = vunpack.c.h.b16 %v542
          %v576 = vunpack.c.l.b16 %v543
          %v577 = vunpack.c.h.b16 %v543
          %v578 = vunpack.c.l.b16 %v544
          %v579 = vunpack.c.h.b16 %v544
          %v580 = vunpack.c.l.b16 %v545
          %v581 = vunpack.c.h.b16 %v545
          %v582 = vunpack.c.l.b16 %v546
          %v583 = vunpack.c.h.b16 %v546
          %v584 = vunpack.c.l.b16 %v547
          %v585 = vunpack.c.h.b16 %v547
          %v586 = vunpack.c.l.b16 %v548
          %v587 = vunpack.c.h.b16 %v548
          %v588 = vunpack.c.l.b16 %v549
          %v589 = vunpack.c.h.b16 %v549
          %v590 = vunpack.c.l.b16 %v550
          %v591 = vunpack.c.h.b16 %v550
          %v592 = vunpack.c.l.b16 %v551
          %v593 = vunpack.c.h.b16 %v551
          %v594 = vunpack.c.l.b16 %v552
          %v595 = vunpack.c.h.b16 %v552
          %v596 = vunpack.c.l.b16 %v553
          %v597 = vunpack.c.h.b16 %v553
          %v598 = vunpack.c.l.b16 %v554
          %v599 = vunpack.c.h.b16 %v554
          %v600 = vunpack.c.l.b16 %v555
          %v601 = vunpack.c.h.b16 %v555
          %v602 = vunpack.c.l.b16 %v556
          %v603 = vunpack.c.h.b16 %v556
          %v604 = vunpack.c.l.b16 %v557
          %v605 = vunpack.c.h.b16 %v557
          %v606 = vpack.c.b16 %v576, %v574
          %v607 = vpack.c.b16 %v577, %v575
          %v608 = vpack.c.b16 %v580, %v578
          %v609 = vpack.c.b16 %v581, %v579
          %v610 = vpack.c.b16 %v584, %v582
          %v611 = vpack.c.b16 %v585, %v583
          %v612 = vpack.c.b16 %v588, %v586
          %v613 = vpack.c.b16 %v589, %v587
          %v614 = vpack.c.b16 %v592, %v590
          %v615 = vpack.c.b16 %v593, %v591
          %v616 = vpack.c.b16 %v596, %v594
          %v617 = vpack.c.b16 %v597, %v595
          %v618 = vpack.c.b16 %v600, %v598
          %v619 = vpack.c.b16 %v601, %v599
          %v620 = vpack.c.b16 %v604, %v602
          %v621 = vpack.c.b16 %v605, %v603
          %638 = vmatprep.subr.bf16.mxu0 %v607
          %639 = vmatpush1.bf16.msra.mxu0 %v606
          %640 = vmatprep.subr.bf16.mxu0 %v609
          %641 = vmatpush1.bf16.msra.mxu0 %v608
          %642 = vmatprep.subr.bf16.mxu0 %v611
          %643 = vmatpush1.bf16.msra.mxu0 %v610
          %644 = vmatprep.subr.bf16.mxu0 %v613
          %645 = vmatpush1.bf16.msra.mxu0 %v612
          %646 = vmatprep.subr.bf16.mxu0 %v615
          %647 = vmatpush1.bf16.msra.mxu0 %v614
          %648 = vmatprep.subr.bf16.mxu0 %v617
          %649 = vmatpush1.bf16.msra.mxu0 %v616
          %650 = vmatprep.subr.bf16.mxu0 %v619
          %651 = vmatpush1.bf16.msra.mxu0 %v618
          %652 = vmatprep.subr.bf16.mxu0 %v621
          %653 = vmatpush1.bf16.msra.mxu0 %v620
          %654 = vmatprep.subr.bf16.mxu0 0
          %655 = vmatpush1.bf16.msra.mxu0 0
          %656 = vmatprep.subr.bf16.mxu0 0
          %657 = vmatpush1.bf16.msra.mxu0 0
          %658 = vmatprep.subr.bf16.mxu0 0
          %659 = vmatpush1.bf16.msra.mxu0 0
          %660 = vmatprep.subr.bf16.mxu0 0
          %661 = vmatpush1.bf16.msra.mxu0 0
          %662 = vmatprep.subr.bf16.mxu0 0
          %663 = vmatpush1.bf16.msra.mxu0 0
          %664 = vmatprep.subr.bf16.mxu0 0
          %665 = vmatpush1.bf16.msra.mxu0 0
          %666 = vmatprep.subr.bf16.mxu0 0
          %667 = vmatpush1.bf16.msra.mxu0 0
          %668 = vmatprep.subr.bf16.mxu0 0
          %669 = vmatpush1.bf16.msra.mxu0 0
          %670 = vmatprep.mubr.bf16.mxu0 0
          %671 = vmatmul.mubr.bf16.gmra.mrb[0].mxu0 %v541
          %v672 = vpop.f32.mrb[0].mxu0
          %v673 = vadd.f32 0.0, %v672
          %v674 = vpop.f32.mrb[0].mxu0
          %v675 = vadd.f32 0.0, %v674
          %v676 = vpop.f32.mrb[0].mxu0
          %v677 = vpop.f32.mrb[0].mxu0
          %678 = vdwg.mxu0
          %v695 = vunpack.c.l.b16 %v525
          %v696 = vunpack.c.h.b16 %v525
          %v697 = vunpack.c.l.b16 %v526
          %v698 = vunpack.c.h.b16 %v526
          %v699 = vunpack.c.l.b16 %v527
          %v700 = vunpack.c.h.b16 %v527
          %v701 = vunpack.c.l.b16 %v528
          %v702 = vunpack.c.h.b16 %v528
          %v703 = vunpack.c.l.b16 %v529
          %v704 = vunpack.c.h.b16 %v529
          %v705 = vunpack.c.l.b16 %v530
          %v706 = vunpack.c.h.b16 %v530
          %v707 = vunpack.c.l.b16 %v531
          %v708 = vunpack.c.h.b16 %v531
          %v709 = vunpack.c.l.b16 %v532
          %v710 = vunpack.c.h.b16 %v532
          %v711 = vunpack.c.l.b16 %v533
          %v712 = vunpack.c.h.b16 %v533
          %v713 = vunpack.c.l.b16 %v534
          %v714 = vunpack.c.h.b16 %v534
          %v715 = vunpack.c.l.b16 %v535
          %v716 = vunpack.c.h.b16 %v535
          %v717 = vunpack.c.l.b16 %v536
          %v718 = vunpack.c.h.b16 %v536
          %v719 = vunpack.c.l.b16 %v537
          %v720 = vunpack.c.h.b16 %v537
          %v721 = vunpack.c.l.b16 %v538
          %v722 = vunpack.c.h.b16 %v538
          %v723 = vunpack.c.l.b16 %v539
          %v724 = vunpack.c.h.b16 %v539
          %v725 = vunpack.c.l.b16 %v540
          %v726 = vunpack.c.h.b16 %v540
          %v727 = vpack.c.b16 %v697, %v695
          %v728 = vpack.c.b16 %v698, %v696
          %v729 = vpack.c.b16 %v701, %v699
          %v730 = vpack.c.b16 %v702, %v700
          %v731 = vpack.c.b16 %v705, %v703
          %v732 = vpack.c.b16 %v706, %v704
          %v733 = vpack.c.b16 %v709, %v707
          %v734 = vpack.c.b16 %v710, %v708
          %v735 = vpack.c.b16 %v713, %v711
          %v736 = vpack.c.b16 %v714, %v712
          %v737 = vpack.c.b16 %v717, %v715
          %v738 = vpack.c.b16 %v718, %v716
          %v739 = vpack.c.b16 %v721, %v719
          %v740 = vpack.c.b16 %v722, %v720
          %v741 = vpack.c.b16 %v725, %v723
          %v742 = vpack.c.b16 %v726, %v724
          %759 = vmatprep.subr.bf16.mxu0 %v728
          %760 = vmatpush1.bf16.msra.mxu0 %v727
          %761 = vmatprep.subr.bf16.mxu0 %v730
          %762 = vmatpush1.bf16.msra.mxu0 %v729
          %763 = vmatprep.subr.bf16.mxu0 %v732
          %764 = vmatpush1.bf16.msra.mxu0 %v731
          %765 = vmatprep.subr.bf16.mxu0 %v734
          %766 = vmatpush1.bf16.msra.mxu0 %v733
          %767 = vmatprep.subr.bf16.mxu0 %v736
          %768 = vmatpush1.bf16.msra.mxu0 %v735
          %769 = vmatprep.subr.bf16.mxu0 %v738
          %770 = vmatpush1.bf16.msra.mxu0 %v737
          %771 = vmatprep.subr.bf16.mxu0 %v740
          %772 = vmatpush1.bf16.msra.mxu0 %v739
          %773 = vmatprep.subr.bf16.mxu0 %v742
          %774 = vmatpush1.bf16.msra.mxu0 %v741
          %775 = vmatprep.subr.bf16.mxu0 0
          %776 = vmatpush1.bf16.msra.mxu0 0
          %777 = vmatprep.subr.bf16.mxu0 0
          %778 = vmatpush1.bf16.msra.mxu0 0
          %779 = vmatprep.subr.bf16.mxu0 0
          %780 = vmatpush1.bf16.msra.mxu0 0
          %781 = vmatprep.subr.bf16.mxu0 0
          %782 = vmatpush1.bf16.msra.mxu0 0
          %783 = vmatprep.subr.bf16.mxu0 0
          %784 = vmatpush1.bf16.msra.mxu0 0
          %785 = vmatprep.subr.bf16.mxu0 0
          %786 = vmatpush1.bf16.msra.mxu0 0
          %787 = vmatprep.subr.bf16.mxu0 0
          %788 = vmatpush1.bf16.msra.mxu0 0
          %789 = vmatprep.subr.bf16.mxu0 0
          %790 = vmatpush1.bf16.msra.mxu0 0
          %791 = vmatprep.mubr.bf16.mxu0 0
          %792 = vmatmul.mubr.bf16.gmra.mrb[0].mxu0 %v524
          %v793 = vpop.f32.mrb[0].mxu0
          %v794 = vadd.f32 %v673, %v793
          %v795 = vpop.f32.mrb[0].mxu0
          %v796 = vadd.f32 %v675, %v795
          %v797 = vpop.f32.mrb[0].mxu0
          %v798 = vpop.f32.mrb[0].mxu0
          %799 = vdwg.mxu0
          %v800 = vld [vmem:[%s5] sm:$0x3]
          %v802 = vlaneseq
          %v803 = vshrl.u32 %v802, 7
          %v804 = vsub.s32 0, %v803
          %v805 = vrot.slane %v800, %v804
          %v806 = vlaneseq
          %v807 = vshrl.u32 %v806, 7
          %v808 = vsub.s32 1, %v807
          %v809 = vrot.slane %v800, %v808
          %v812 = vadd.f32 %v794, %v805
          %v813 = vadd.f32 %v796, %v809
          %v814 = vsub.f32 0.0, %v813
          %v815 = vmul.f32 %v814, 1.442695
          %v816 = vpow.pop %v815
          %v817 = vadd.f32 %v816, 1.0
          %v818 = vrcp.pop %v817
          %v819 = vmul.f32 %v812, %v818
          %820 = vst [vmem:[%s270] sm:$0x1] %v819
        $region52: #{light_attention_forward.1} parent=43 // pred_fallthru
          _
        %s821 = sand.u32 %s176, 1
        %s822 = scalar_lea.sflag [#allocation4], %s821
        %s823 = sand.u32 %s176, 1
        %s824 = scalar_lea.vmem [#allocation3], %s823
        // Predicated region
        $region53: #{light_attention_forward.1} parent=43 // pred_check
          %p825 = pneg %p186
        $region54: #{light_attention_forward.1} parent=43 // pred_check_branch
          %827 = sbr.rel (%p825) target = $region56
        $region55: #{light_attention_forward.1} parent=43 // pred_region
          %s829 = ssub.s32 16, 16
          %830 = vsyncadd %s822, %s829
          %s831 = smul.addr %s24, 16
          %s832 = scalar_lea.hbm %s6, %s831
          %s834 = sshll.u32 %s824, 4
          %s835 = int_to_ptr.vmem [resolvable:$true] %s834
          %837 = dma.vmem_to_hbm [thread:$0]  %s835, 16, %s832, %s822
        $region56: #{light_attention_forward.1} parent=43 // pred_fallthru
          _
      $region44: #{light_attention_forward.1} parent=5 // pred_fallthru
        _
      %p838 = scmp.le.s32.totalorder 2, %s15
      // Predicated region
      $region57: #{light_attention_forward.1} parent=5 // pred_check
        %p839 = pneg %p838
      $region58: #{light_attention_forward.1} parent=5 // pred_check_branch
        %841 = sbr.rel (%p839) target = $region60
      $region59: #{light_attention_forward.1} parent=5 // pred_region
        %s842 = ssub.s32 %s15, 2
        // Predicated region
        $region61: #{light_attention_forward.1} parent=59 // pred_check
          %p843 = pneg %p192
        $region62: #{light_attention_forward.1} parent=59 // pred_check_branch
          %845 = sbr.rel (%p843) target = $region64
        $region63: #{light_attention_forward.1} parent=59 // pred_region
          %s846 = sand.u32 %s177, 1
          %s847 = scalar_lea.sflag [#allocation4], %s846
          %s848 = sand.u32 %s177, 1
          %s849 = scalar_lea.vmem [#allocation3], %s848
          %850 = dma.done %s847, 16
        $region64: #{light_attention_forward.1} parent=59 // pred_fallthru
          _
      $region60: #{light_attention_forward.1} parent=5 // pred_fallthru
        _
    $region6: #{light_attention_forward.1} parent=1 // loop_footer
      %s19 = sadd.s32 1, %s15
    $region7: #{light_attention_forward.1} parent=1 // loop_footer_branch
      %14 = sbr.rel target = $region3
    $region8: #{light_attention_forward.1} parent=1 // loop_exit
      _
    %851 = vsyncpa [#allocation4], 1
    %s852 = scalar_lea.sflag [#allocation4], 1
    %853 = vsyncpa %s852, 1

</llo_original>
